<compile_context>
chip_gen: v7x
topology: tpu7x:2x2x1
jax: 0.10.0
libtpu: 0.0.40
codegen_flags: <defaults>
</compile_context>

<pallas_src>
import functools
import math

import jax
import jax.numpy as jnp
from jax.experimental import pallas as pl
from jax.experimental.pallas import tpu as pltpu

LN_EPS = 1e-12

# Safe on every generation: <= v7x's 64 MiB physical VMEM, above the 16/32 MiB scoped defaults.
# On v5e/v6e (128 MiB physical) this can be raised toward ~100 MiB for production shapes.
VMEM_LIMIT_BYTES = 48 * 1024 * 1024


# --------------------- Kernel 1: attnLayerNorm + fused QKV projection ---------------------

def _ln_qkv_kernel(h_ref, g_ref, b_ref, wqkv_ref, bqkv_ref, qkv_ref, *, eps):
    h = h_ref[...]                                                        # (TQ, H) f32
    mu = jnp.mean(h, axis=-1, keepdims=True)
    var = jnp.mean((h - mu) ** 2, axis=-1, keepdims=True)
    x = g_ref[...] * ((h - mu) * jax.lax.rsqrt(var + eps)) + b_ref[...]   # attnLayerNorm
    # q|k|v fused; the Q columns of wqkv/bqkv already carry the 1/sqrt(d_head) scale.
    qkv = jnp.dot(x.astype(jnp.bfloat16), wqkv_ref[...],
                  preferred_element_type=jnp.float32) + bqkv_ref[...]
    qkv_ref[...] = qkv.astype(qkv_ref.dtype)


def ln_qkv(hidden_states, ln_g, ln_b, wqkv, bqkv, *, q_block):
    B, L, H = hidden_states.shape
    H3 = wqkv.shape[1]
    nqt = L // q_block
    # NOTE (prod tuning): wqkv/bqkv have constant index_maps so they are DMA'd once; at
    # production sizes mark them pipeline_mode=pl.Buffered(1) to drop the second VMEM buffer.
    # TODO(synk): for very long sequences, consider also emitting head-major (B, N, L, d) k/v
    # copies here so K2's per-KV-tile DMAs are fully contiguous instead of 3H-strided rows.
    return pl.pallas_call(
        functools.partial(_ln_qkv_kernel, eps=LN_EPS),
        grid=(B, nqt),
        in_specs=[
            pl.BlockSpec((None, q_block, H), lambda b, t: (b, t, 0)),
            pl.BlockSpec((1, H), lambda b, t: (0, 0)),
            pl.BlockSpec((1, H), lambda b, t: (0, 0)),
            pl.BlockSpec((H, H3), lambda b, t: (0, 0)),
            pl.BlockSpec((1, H3), lambda b, t: (0, 0)),
        ],
        out_specs=pl.BlockSpec((None, q_block, H3), lambda b, t: (b, t, 0)),
        out_shape=jax.ShapeDtypeStruct((B, L, H3), jnp.bfloat16),
        compiler_params=pltpu.CompilerParams(
            dimension_semantics=("parallel", "parallel"),
            vmem_limit_bytes=VMEM_LIMIT_BYTES),
    )(hidden_states, ln_g, ln_b, wqkv, bqkv)


# ------------- Kernel 2: fused flash-style attention (scores + softmax + P@V) -------------

def _flash_attn_kernel(q_ref, k_ref, v_ref, ctx_ref, m_sc, l_sc, acc_sc):
    kt = pl.program_id(3)

    @pl.when(kt == 0)
    def _():
        m_sc[...] = jnp.full(m_sc.shape, -jnp.inf, jnp.float32)
        l_sc[...] = jnp.zeros(l_sc.shape, jnp.float32)
        acc_sc[...] = jnp.zeros(acc_sc.shape, jnp.float32)

    # q is already scaled (scale folded into wqkv at parameter-prep time): no per-KV-tile
    # elementwise work on q inside the hot loop.
    q = q_ref[...]                                                         # (TQ, d) bf16
    k = k_ref[...]                                                         # (TK, d) bf16
    s = jax.lax.dot_general(q, k, (((1,), (1,)), ((), ())),
                            preferred_element_type=jnp.float32)            # (TQ, TK)

    m_prev = m_sc[...]
    m_new = jnp.maximum(m_prev, jnp.max(s, axis=-1, keepdims=True))
    alpha = jnp.exp(m_prev - m_new)
    p = jnp.exp(s - m_new)
    l_sc[...] = alpha * l_sc[...] + jnp.sum(p, axis=-1, keepdims=True)
    acc_sc[...] = alpha * acc_sc[...] + jnp.dot(
        p.astype(jnp.bfloat16), v_ref[...], preferred_element_type=jnp.float32)
    m_sc[...] = m_new

    @pl.when(kt == pl.num_programs(3) - 1)
    def _():
        # attention-probs dropout is identity in eval mode
        ctx_ref[...] = (acc_sc[...] *
                        pl.reciprocal(l_sc[...], approx=True)).astype(ctx_ref.dtype)


def flash_attention(qkv, *, n_head, d_head, q_block, kv_block):
    B, L, H3 = qkv.shape
    H = H3 // 3
    N = n_head
    nqt = L // q_block
    nkt = L // kv_block
    # TODO(synk): attention_mask is not wired (attention_mask=None in this configuration).
    return pl.pallas_call(
        _flash_attn_kernel,
        grid=(B, N, nqt, nkt),
        in_specs=[
            # q / k / v head slices taken directly from the fused qkv tensor by column block.
            pl.BlockSpec((None, q_block, d_head), lambda b, h, qt, kt: (b, qt, h)),
            pl.BlockSpec((None, kv_block, d_head), lambda b, h, qt, kt: (b, kt, N + h)),
            pl.BlockSpec((None, kv_block, d_head), lambda b, h, qt, kt: (b, kt, 2 * N + h)),
        ],
        # ctx written straight into [B, L, H] layout at column offset h*d_head.
        out_specs=pl.BlockSpec((None, q_block, d_head), lambda b, h, qt, kt: (b, qt, h)),
        out_shape=jax.ShapeDtypeStruct((B, L, H), jnp.bfloat16),
        scratch_shapes=[
            pltpu.VMEM((q_block, 1), jnp.float32),        # running max
            pltpu.VMEM((q_block, 1), jnp.float32),        # running denominator
            pltpu.VMEM((q_block, d_head), jnp.float32),   # running P@V accumulator
        ],
        compiler_params=pltpu.CompilerParams(
            dimension_semantics=("parallel", "parallel", "parallel", "arbitrary"),
            vmem_limit_bytes=VMEM_LIMIT_BYTES),
    )(qkv, qkv, qkv)


# ------- Kernel 3: o-projection + residual + ffnLayerNorm + I-tiled FFN + residual -------

def _o_ffn_kernel(ctx_ref, res_ref, wo_ref, bo_ref, g2_ref, beta2_ref,
                  w1_ref, b1_ref, w2_ref, b2_ref, out_ref,
                  h1_sc, x_sc, ffn_acc, *, eps):
    it = pl.program_id(2)

    @pl.when(it == 0)
    def _():
        # self.o(context) then dropout_add with the pre-LN residual (eval: residual + x)
        attn_out = jnp.dot(ctx_ref[...], wo_ref[...],
                           preferred_element_type=jnp.float32) + bo_ref[...]
        h1 = res_ref[...] + attn_out
        h1_sc[...] = h1
        # ffnLayerNorm (pre-LN on the FFN branch); computed once, reused for all I-tiles.
        mu = jnp.mean(h1, axis=-1, keepdims=True)
        var = jnp.mean((h1 - mu) ** 2, axis=-1, keepdims=True)
        x = g2_ref[...] * ((h1 - mu) * jax.lax.rsqrt(var + eps)) + beta2_ref[...]
        x_sc[...] = x.astype(x_sc.dtype)
        ffn_acc[...] = jnp.zeros(ffn_acc.shape, jnp.float32)

    # PositionWiseFeedForward tile: Linear -> relu -> Linear over one intermediate slab.
    # relu is elementwise over the intermediate dim, so tiling it is exact.
    a = jnp.dot(x_sc[...], w1_ref[...], preferred_element_type=jnp.float32) + b1_ref[...]
    a = jnp.maximum(a, 0.0)
    ffn_acc[...] += jnp.dot(a.astype(jnp.bfloat16), w2_ref[...],
                            preferred_element_type=jnp.float32)

    @pl.when(it == pl.num_programs(2) - 1)
    def _():
        # final dropout_add; second-Linear bias added once.
        out_ref[...] = (h1_sc[...] + ffn_acc[...] + b2_ref[...]).astype(out_ref.dtype)


def o_proj_ffn(ctx, residual, wo, bo, ln_g, ln_b, w1, b1, w2, b2, *, q_block, inter_block):
    B, L, H = residual.shape
    inter = w1.shape[1]
    nqt = L // q_block
    nit = inter // inter_block
    # NOTE (prod tuning): wo/bo/ln2/b2 have constant index_maps (DMA'd once); mark them
    # pipeline_mode=pl.Buffered(1) at production sizes to drop the redundant second buffer.
    # NOTE: output kept f32 to match the PyTorch residual stream; if the downstream consumer
    # accepts bf16, switching out_shape to bf16 halves K3's HBM writeback bytes.
    return pl.pallas_call(
        functools.partial(_o_ffn_kernel, eps=LN_EPS),
        grid=(B, nqt, nit),
        in_specs=[
            pl.BlockSpec((None, q_block, H), lambda b, t, i: (b, t, 0)),   # ctx (bf16)
            pl.BlockSpec((None, q_block, H), lambda b, t, i: (b, t, 0)),   # residual (f32)
            pl.BlockSpec((H, H), lambda b, t, i: (0, 0)),                  # wo
            pl.BlockSpec((1, H), lambda b, t, i: (0, 0)),                  # bo
            pl.BlockSpec((1, H), lambda b, t, i: (0, 0)),                  # ln2 gamma
            pl.BlockSpec((1, H), lambda b, t, i: (0, 0)),                  # ln2 beta
            pl.BlockSpec((H, inter_block), lambda b, t, i: (0, i)),        # w1 I-slab
            pl.BlockSpec((1, inter_block), lambda b, t, i: (0, i)),        # b1 I-slab
            pl.BlockSpec((inter_block, H), lambda b, t, i: (i, 0)),        # w2 I-slab
            pl.BlockSpec((1, H), lambda b, t, i: (0, 0)),                  # b2
        ],
        out_specs=pl.BlockSpec((None, q_block, H), lambda b, t, i: (b, t, 0)),
        out_shape=jax.ShapeDtypeStruct((B, L, H), jnp.float32),
        scratch_shapes=[
            pltpu.VMEM((q_block, H), jnp.float32),    # h1 = residual + o-proj
            pltpu.VMEM((q_block, H), jnp.bfloat16),   # LN2 output (FFN input)
            pltpu.VMEM((q_block, H), jnp.float32),    # FFN output accumulator over I-tiles
        ],
        compiler_params=pltpu.CompilerParams(
            dimension_semantics=("parallel", "parallel", "arbitrary"),
            vmem_limit_bytes=VMEM_LIMIT_BYTES),
    )(ctx, residual, wo, bo, ln_g, ln_b, w1, b1, w2, b2)


# ----------------------------------- layer forward -----------------------------------

def t5_layer_forward(params, hidden_states, *, q_block=256, kv_block=256, inter_block=2048):
    """T5Layer forward.  Defaults target v6e/v7x (256-wide MXU); on v5e 128-wide q/kv blocks
    already saturate the 128-wide MXU."""
    B, L, H = hidden_states.shape
    n_head = params["n_head"]
    d_head = H // n_head
    inter = params["w1"].shape[1]
    q_block = min(q_block, L)
    kv_block = min(kv_block, L)
    inter_block = min(inter_block, inter)

    assert L % q_block == 0 and L % kv_block == 0, "seq len must be divisible by tile sizes"
    # bf16 blocks need a sublane multiple of 16; per-head column slices of the fused qkv
    # tensor are lane-dense only when d_head is a multiple of 128.
    assert q_block % 16 == 0 and kv_block % 16 == 0, "bf16 tiles need 16-sublane multiples"
    assert d_head % 128 == 0, "per-head column BlockSpec slices require d_head % 128 == 0"
    assert inter % inter_block == 0 and inter_block % 128 == 0

    # TODO(synk): decoder branches (cross-attention, past_key_value caching) and conditional
    # LayerNorm are not wired — is_decoder=False / conditional_size=False in this config.
    qkv = ln_qkv(hidden_states, params["ln1_g"], params["ln1_b"],
                 params["wqkv"], params["bqkv"], q_block=q_block)
    ctx = flash_attention(qkv, n_head=n_head, d_head=d_head,
                          q_block=q_block, kv_block=kv_block)
    out = o_proj_ffn(ctx, hidden_states, params["wo"], params["bo"],
                     params["ln2_g"], params["ln2_b"],
                     params["w1"], params["b1"], params["w2"], params["b2"],
                     q_block=q_block, inter_block=inter_block)
    return out


# ----------------------------------- params -----------------------------------

def init_params(key, H, n_head, inter):
    """Raw per-projection parameters, matching the PyTorch module (weights pre-transposed so
    y = x @ W, stored bf16 for native MXU matmuls; biases f32)."""
    ks = jax.random.split(key, 16)
    wf = lambda k, s: (0.05 * jax.random.normal(k, s, jnp.float32)).astype(jnp.bfloat16)
    vf = lambda k, s: 0.05 * jax.random.normal(k, s, jnp.float32)
    return {
        "n_head": n_head,
        "wq": wf(ks[0], (H, H)), "bq": vf(ks[1], (1, H)),
        "wk": wf(ks[2], (H, H)), "bk": vf(ks[3], (1, H)),
        "wv": wf(ks[4], (H, H)), "bv": vf(ks[5], (1, H)),
        "wo": wf(ks[6], (H, H)), "bo": vf(ks[7], (1, H)),
        "w1": wf(ks[8], (H, inter)), "b1": vf(ks[9], (1, inter)),
        "w2": wf(ks[10], (inter, H)), "b2": vf(ks[11], (1, H)),
        "ln1_g": 1.0 + 0.05 * jax.random.normal(ks[12], (1, H), jnp.float32),
        "ln1_b": vf(ks[13], (1, H)),
        "ln2_g": 1.0 + 0.05 * jax.random.normal(ks[14], (1, H), jnp.float32),
        "ln2_b": vf(ks[15], (1, H)),
    }


def prepare_params(raw):
    """One-time parameter prep for the kernels: fuse q/k/v into a single (H, 3H) matrix and
    fold the 1/sqrt(d_head) attention scale (attention_scale=True) into the Q columns, so the
    flash-attention inner loop carries no per-KV-tile elementwise q scaling."""
    H = raw["wq"].shape[0]
    d_head = H // raw["n_head"]
    scale = 1.0 / math.sqrt(d_head)
    wq_scaled = (raw["wq"].astype(jnp.float32) * scale).astype(jnp.bfloat16)
    bq_scaled = raw["bq"] * scale
    p = dict(raw)
    p["wqkv"] = jnp.concatenate([wq_scaled, raw["wk"], raw["wv"]], axis=1)   # (H, 3H) bf16
    p["bqkv"] = jnp.concatenate([bq_scaled, raw["bk"], raw["bv"]], axis=1)   # (1, 3H) f32
    return p


# ------------------------- pure-JAX reference (same bf16 matmul casts) -------------------------

def _layernorm_ref(x, g, b):
    mu = x.mean(-1, keepdims=True)
    var = ((x - mu) ** 2).mean(-1, keepdims=True)
    return g * ((x - mu) * jax.lax.rsqrt(var + LN_EPS)) + b


def reference_forward(params, hidden_states):
    B, L, H = hidden_states.shape
    n = params["n_head"]
    d = H // n
    scale = 1.0 / math.sqrt(d)
    x = _layernorm_ref(hidden_states, params["ln1_g"], params["ln1_b"])
    xb = x.astype(jnp.bfloat16)
    q = (jnp.dot(xb, params["wq"], preferred_element_type=jnp.float32) + params["bq"]).astype(jnp.bfloat16)
    k = (jnp.dot(xb, params["wk"], preferred_element_type=jnp.float32) + params["bk"]).astype(jnp.bfloat16)
    v = (jnp.dot(xb, params["wv"], preferred_element_type=jnp.float32) + params["bv"]).astype(jnp.bfloat16)
    qh = q.reshape(B, L, n, d).transpose(0, 2, 1, 3)
    kh = k.reshape(B, L, n, d).transpose(0, 2, 1, 3)
    vh = v.reshape(B, L, n, d).transpose(0, 2, 1, 3)
    s = jnp.einsum("bnqd,bnkd->bnqk", qh, kh, preferred_element_type=jnp.float32) * scale
    p = jax.nn.softmax(s, axis=-1)
    ctxh = jnp.einsum("bnqk,bnkd->bnqd", p.astype(jnp.bfloat16), vh,
                      preferred_element_type=jnp.float32)
    ctx = ctxh.transpose(0, 2, 1, 3).reshape(B, L, H).astype(jnp.bfloat16)
    attn_out = jnp.dot(ctx, params["wo"], preferred_element_type=jnp.float32) + params["bo"]
    h1 = hidden_states + attn_out
    x2 = _layernorm_ref(h1, params["ln2_g"], params["ln2_b"])
    a = jnp.maximum(jnp.dot(x2.astype(jnp.bfloat16), params["w1"],
                            preferred_element_type=jnp.float32) + params["b1"], 0.0)
    f = jnp.dot(a.astype(jnp.bfloat16), params["w2"],
                preferred_element_type=jnp.float32) + params["b2"]
    return h1 + f


if __name__ == "__main__":
    # Small but lane-aligned shapes: d_head = 128 so per-head BlockSpec column slices are
    # lane-dense.  q/kv/inter tile sizes chosen to exercise the Q-tiling, the online-softmax
    # KV loop, and the FFN intermediate-dim accumulator loop (16-multiples for bf16 sublanes).
    B, L, H, n_head, inter = 2, 32, 256, 2, 512

    key = jax.random.PRNGKey(0)
    kp, kh = jax.random.split(key)
    raw_params = init_params(kp, H, n_head, inter)
    params = prepare_params(raw_params)           # fuse qkv + fold attention scale (once)
    hidden_states = jax.random.normal(kh, (B, L, H), dtype=jnp.float32)

    out = t5_layer_forward(params, hidden_states, q_block=16, kv_block=16, inter_block=256)
    out = jax.block_until_ready(out)

    ref = reference_forward(raw_params, hidden_states)
    assert out.shape == (B, L, H)
    err = float(jnp.max(jnp.abs(out - ref)))
    assert bool(jnp.allclose(out, ref, atol=2e-2, rtol=2e-2)), f"max abs diff = {err}"
    print("KERNEL_OK")
</pallas_src>

<mosaic_0001>
module attributes {stable_mosaic.version = 11 : i64} {
  func.func @_ln_qkv_kernel(%arg0: i32, %arg1: i32, %arg2: memref<1x16x256xf32, #tpu.memory_space<vmem>>, %arg3: memref<1x256xf32, #tpu.memory_space<vmem>>, %arg4: memref<1x256xf32, #tpu.memory_space<vmem>>, %arg5: memref<256x768xbf16, #tpu.memory_space<vmem>>, %arg6: memref<1x768xf32, #tpu.memory_space<vmem>>, %arg7: memref<1x16x768xbf16, #tpu.memory_space<vmem>>) attributes {dimension_semantics = [#tpu.dimension_semantics<parallel>, #tpu.dimension_semantics<parallel>], iteration_bounds = array<i64: 2, 2>, scalar_prefetch = 0 : i64, scratch_operands = 0 : i64, tpu.core_type = #tpu.core_type<tc>, window_params = [{transform_indices = @transform_0, window_bounds = array<i64: 1, 16, 256>}, {pipeline_mode = #tpu.pipeline_mode<synchronous>, transform_indices = @transform_1, window_bounds = array<i64: 1, 256>}, {pipeline_mode = #tpu.pipeline_mode<synchronous>, transform_indices = @transform_2, window_bounds = array<i64: 1, 256>}, {pipeline_mode = #tpu.pipeline_mode<synchronous>, transform_indices = @transform_3, window_bounds = array<i64: 256, 768>}, {pipeline_mode = #tpu.pipeline_mode<synchronous>, transform_indices = @transform_4, window_bounds = array<i64: 1, 768>}, {transform_indices = @transform_5, window_bounds = array<i64: 1, 16, 768>}]} {
    %c0 = arith.constant 0 : index
    %c0_0 = arith.constant 0 : index
    %c0_1 = arith.constant 0 : index
    %0 = vector.load %arg2[%c0, %c0_0, %c0_1] : memref<1x16x256xf32, #tpu.memory_space<vmem>>, vector<1x16x256xf32>
    %1 = vector.shape_cast %0 : vector<1x16x256xf32> to vector<16x256xf32>
    %cst = arith.constant dense<0.000000e+00> : vector<16xf32>
    %2 = vector.multi_reduction <add>, %1, %cst [1] : vector<16x256xf32> to vector<16xf32>
    %3 = vector.shape_cast %2 : vector<16xf32> to vector<16x1xf32>
    %cst_2 = arith.constant 2.560000e+02 : f32
    %4 = vector.broadcast %cst_2 : f32 to vector<16x1xf32>
    %5 = arith.divf %3, %4 : vector<16x1xf32>
    %6 = vector.broadcast %5 : vector<16x1xf32> to vector<16x256xf32>
    %7 = arith.subf %1, %6 : vector<16x256xf32>
    %8 = arith.mulf %7, %7 : vector<16x256xf32>
    %cst_3 = arith.constant dense<0.000000e+00> : vector<16xf32>
    %9 = vector.multi_reduction <add>, %8, %cst_3 [1] : vector<16x256xf32> to vector<16xf32>
    %10 = vector.shape_cast %9 : vector<16xf32> to vector<16x1xf32>
    %cst_4 = arith.constant 2.560000e+02 : f32
    %11 = vector.broadcast %cst_4 : f32 to vector<16x1xf32>
    %12 = arith.divf %10, %11 : vector<16x1xf32>
    %c0_5 = arith.constant 0 : index
    %c0_6 = arith.constant 0 : index
    %13 = vector.load %arg3[%c0_5, %c0_6] : memref<1x256xf32, #tpu.memory_space<vmem>>, vector<1x256xf32>
    %14 = vector.broadcast %5 : vector<16x1xf32> to vector<16x256xf32>
    %15 = arith.subf %1, %14 : vector<16x256xf32>
    %cst_7 = arith.constant 9.99999996E-13 : f32
    %16 = vector.broadcast %cst_7 : f32 to vector<16x1xf32>
    %17 = arith.addf %12, %16 : vector<16x1xf32>
    %18 = math.rsqrt %17 : vector<16x1xf32>
    %19 = vector.broadcast %18 : vector<16x1xf32> to vector<16x256xf32>
    %20 = arith.mulf %15, %19 : vector<16x256xf32>
    %21 = vector.broadcast %13 : vector<1x256xf32> to vector<16x256xf32>
    %22 = arith.mulf %21, %20 : vector<16x256xf32>
    %c0_8 = arith.constant 0 : index
    %c0_9 = arith.constant 0 : index
    %23 = vector.load %arg4[%c0_8, %c0_9] : memref<1x256xf32, #tpu.memory_space<vmem>>, vector<1x256xf32>
    %24 = vector.broadcast %23 : vector<1x256xf32> to vector<16x256xf32>
    %25 = arith.addf %22, %24 : vector<16x256xf32>
    %26 = arith.truncf %25 : vector<16x256xf32> to vector<16x256xbf16>
    %c0_10 = arith.constant 0 : index
    %c0_11 = arith.constant 0 : index
    %27 = vector.load %arg5[%c0_10, %c0_11] : memref<256x768xbf16, #tpu.memory_space<vmem>>, vector<256x768xbf16>
    %cst_12 = arith.constant dense<0.000000e+00> : vector<16x768xf32>
    %28 = tpu.matmul %26, %27, %cst_12 {dimension_numbers = #tpu.dot_dimension_numbers<[1], [0], [0], [1], [0, 0, 1, 1], [], []>} : vector<16x256xbf16>, vector<256x768xbf16>, vector<16x768xf32> -> vector<16x768xf32>
    %c0_13 = arith.constant 0 : index
    %c0_14 = arith.constant 0 : index
    %29 = vector.load %arg6[%c0_13, %c0_14] : memref<1x768xf32, #tpu.memory_space<vmem>>, vector<1x768xf32>
    %30 = vector.broadcast %29 : vector<1x768xf32> to vector<16x768xf32>
    %31 = arith.addf %28, %30 : vector<16x768xf32>
    %32 = arith.truncf %31 : vector<16x768xf32> to vector<16x768xbf16>
    %c0_15 = arith.constant 0 : index
    %c0_16 = arith.constant 0 : index
    %c0_17 = arith.constant 0 : index
    %33 = vector.load %arg7[%c0_15, %c0_16, %c0_17] : memref<1x16x768xbf16, #tpu.memory_space<vmem>>, vector<1x16x768xbf16>
    %34 = vector.shape_cast %33 : vector<1x16x768xbf16> to vector<16x768xbf16>
    %35 = vector.shape_cast %32 : vector<16x768xbf16> to vector<1x16x768xbf16>
    tpu.vector_store %arg7[%c0_15, %c0_16, %c0_17], %35 {strides = array<i32>} : memref<1x16x768xbf16, #tpu.memory_space<vmem>>, vector<1x16x768xbf16>,
    return
  }
  func.func @transform_0(%arg0: i32, %arg1: i32) -> (i32, i32, i32) {
    %c0_i32 = arith.constant 0 : i32
    %c0_i32_0 = arith.constant 0 : i32
    return %arg0, %arg1, %c0_i32 : i32, i32, i32
  }
  func.func @transform_1(%arg0: i32, %arg1: i32) -> (i32, i32) {
    %c0_i32 = arith.constant 0 : i32
    %c0_i32_0 = arith.constant 0 : i32
    %c0_i32_1 = arith.constant 0 : i32
    return %c0_i32, %c0_i32_0 : i32, i32
  }
  func.func @transform_2(%arg0: i32, %arg1: i32) -> (i32, i32) {
    %c0_i32 = arith.constant 0 : i32
    %c0_i32_0 = arith.constant 0 : i32
    %c0_i32_1 = arith.constant 0 : i32
    return %c0_i32, %c0_i32_0 : i32, i32
  }
  func.func @transform_3(%arg0: i32, %arg1: i32) -> (i32, i32) {
    %c0_i32 = arith.constant 0 : i32
    %c0_i32_0 = arith.constant 0 : i32
    %c0_i32_1 = arith.constant 0 : i32
    return %c0_i32, %c0_i32_0 : i32, i32
  }
  func.func @transform_4(%arg0: i32, %arg1: i32) -> (i32, i32) {
    %c0_i32 = arith.constant 0 : i32
    %c0_i32_0 = arith.constant 0 : i32
    %c0_i32_1 = arith.constant 0 : i32
    return %c0_i32, %c0_i32_0 : i32, i32
  }
  func.func @transform_5(%arg0: i32, %arg1: i32) -> (i32, i32, i32) {
    %c0_i32 = arith.constant 0 : i32
    %c0_i32_0 = arith.constant 0 : i32
    return %arg0, %arg1, %c0_i32 : i32, i32, i32
  }
}

</mosaic_0001>

<llo_original>
// kernel: tpu_custom_call.1
$region0: #{tpu_custom_call.1}
  #allocation0 [shape = 'u32[]', space=smem, size = 0x4, offset = 0x4, fixed_abs, tag = 'smem constant byte address 0x4 - core index']
  #allocation1 [shape = 'u32[144,128]{1,0:T(1,128)}', space=vmem, size = 0x12000, scoped, tag = 'internal scratch']
  %s0 = inlined_call_operand.hbm [shape: f32[2,32,256], index: 0, kind: input, shape index: {}]
  %s1 = inlined_call_operand.vmem [shape: f32[1,256], index: 1, kind: input, shape index: {}]
  %s2 = inlined_call_operand.vmem [shape: f32[1,256], index: 2, kind: input, shape index: {}]
  %s3 = inlined_call_operand.hbm [shape: bf16[256,768], index: 3, kind: input, shape index: {}]
  %s4 = inlined_call_operand.vmem [shape: f32[1,768], index: 4, kind: input, shape index: {}]
  %s5 = inlined_call_operand.hbm [shape: bf16[2,32,768], index: 5, kind: output, shape index: {}]
  %s6 = sld [smem:[#allocation0]]
  $region61: #{tpu_custom_call.1} parent=0
    _
  %s8 = ssub.s32 1, %s6
  %s9 = scalar_select 0, %s8, %s6
  $region1: #{tpu_custom_call.1} parent=0
    #allocation2 [shape = 'u8[32768]{0}', space=vmem, size = 0x8000, scoped, tag = 'input window, operand 0']
    #allocation3 [shape = 's32[2]{0}', space=sflag, size = 0x8, scoped, tag = 'scoped memory for tpu_custom_call.1']
    #allocation4 [shape = 's32[2]{0}', space=sflag, size = 0x8, scoped, tag = 'scoped memory for tpu_custom_call.1']
    #allocation5 [shape = 'u8[393216]{0}', space=vmem, size = 0x60000, scoped, tag = 'input window, operand 3, single buffered']
    #allocation6 [shape = 's32[1]{0}', space=sflag, size = 0x4, scoped, tag = 'scoped memory for tpu_custom_call.1']
    #allocation7 [shape = 'u8[49152]{0}', space=vmem, size = 0xc000, scoped, tag = 'output window, operand 0']
    %10 = vsyncpa [#allocation3], 0
    %s11 = scalar_lea.sflag [#allocation3], 1
    %12 = vsyncpa %s11, 0
    %13 = vsyncpa [#allocation6], 0
    %14 = vsyncpa [#allocation4], 0
    %s15 = scalar_lea.sflag [#allocation4], 1
    %16 = vsyncpa %s15, 0
    loop: start=0, step=1, limit=6
    $region2: #{tpu_custom_call.1} parent=1 // loop_pre_header
      _
    $region3: #{tpu_custom_call.1} parent=1 // loop_header
      %s18 = sphi 0, %s22
      %p19 = scmp.ge.s32.totalorder %s18, 6
      %s25 = sphi 0, %s37
      %s26 = sphi 0, %s33
      %s27 = sphi 0, %s25
      %s28 = sphi 0, %s26
      %s29 = sphi 0, %s27
      %s30 = sphi 0, %s28
      %s42 = sphi 0, %s44
      %s45 = sphi 0, %s42
      %s46 = sphi 0, %s45
      %s62 = sphi 0, %s46
      %s66 = sphi 0, %s66
      %s68 = sphi 0, %s66
      %s69 = sphi 0, %s68
      %s83 = sphi 0, %s69
      %s87 = sphi 0, %s87
      %s89 = sphi 0, %s87
      %s90 = sphi 0, %s89
      %s104 = sphi 0, %s90
      %s108 = sphi 0, %s108
      %s110 = sphi 0, %s108
      %s111 = sphi 0, %s110
      %s125 = sphi 0, %s111
      %s129 = sphi 0, %s129
      %s131 = sphi 0, %s129
      %s132 = sphi 0, %s131
      %s146 = sphi 0, %s132
      %s154 = sphi 0, %s156
      %s157 = sphi 0, %s154
      %s158 = sphi 0, %s157
      %s174 = sphi 0, %s158
    $region4: #{tpu_custom_call.1} parent=1 // loop_header_branch
      %21 = sbr.rel (%p19) target = $region8
    $region5: #{tpu_custom_call.1} parent=1 // loop_body
      %s23 = ssub.s32 %s18, 1
      %s24 = ssub.s32 %s18, 2
      %s31 = sadd.s32 1, %s26
      %p32 = scmp.ge.s32.totalorder %s31, 2
      %s33 = scalar_select %p32, 0, %s31
      %s34 = sadd.s32 1, %s25
      %s35 = scalar_select %p32, %s34, %s25
      %p36 = scmp.ge.s32.totalorder %s35, 2
      %s37 = scalar_select %p36, 0, %s35
      %s38 = ssub.s32 %s25, %s37
      %s39 = ssub.s32 %s26, %s33
      %s40 = sor.u32 %s38, %s39
      %p41 = scmp.eq.s32.totalorder %s40, 0
      %s43 = sadd.s32 %s42, 1
      %s44 = scalar_select %p41, %s42, %s43
      %p47 = pneg %p41
      %p48 = scmp.eq.s32.totalorder %s18, 3
      %p49 = por %p47, %p48
      %p50 = scmp.ne.s32.totalorder %s42, %s45
      %p51 = scmp.eq.s32.totalorder %s18, 0
      %p52 = por %p50, %p51
      %p53 = scmp.ne.s32.totalorder %s42, %s45
      %p54 = scmp.eq.s32.totalorder %s23, 3
      %p55 = por %p53, %p54
      %p56 = scmp.ne.s32.totalorder %s45, %s46
      %p57 = scmp.eq.s32.totalorder %s23, 0
      %p58 = por %p56, %p57
      %p59 = scmp.ne.s32.totalorder %s45, %s46
      %p60 = scmp.eq.s32.totalorder %s24, 3
      %p61 = por %p59, %p60
      %p63 = scmp.ne.s32.totalorder %s46, %s62
      %p64 = scmp.eq.s32.totalorder %s24, 0
      %p65 = por %p63, %p64
      %s67 = sadd.s32 %s66, 1
      %p70 = scmp.eq.s32.totalorder %s18, 3
      %p71 = scmp.ne.s32.totalorder %s66, %s68
      %p72 = scmp.eq.s32.totalorder %s18, 0
      %p73 = por %p71, %p72
      %p74 = scmp.ne.s32.totalorder %s66, %s68
      %p75 = scmp.eq.s32.totalorder %s23, 3
      %p76 = por %p74, %p75
      %p77 = scmp.ne.s32.totalorder %s68, %s69
      %p78 = scmp.eq.s32.totalorder %s23, 0
      %p79 = por %p77, %p78
      %p80 = scmp.ne.s32.totalorder %s68, %s69
      %p81 = scmp.eq.s32.totalorder %s24, 3
      %p82 = por %p80, %p81
      %p84 = scmp.ne.s32.totalorder %s69, %s83
      %p85 = scmp.eq.s32.totalorder %s24, 0
      %p86 = por %p84, %p85
      %s88 = sadd.s32 %s87, 1
      %p91 = scmp.eq.s32.totalorder %s18, 3
      %p92 = scmp.ne.s32.totalorder %s87, %s89
      %p93 = scmp.eq.s32.totalorder %s18, 0
      %p94 = por %p92, %p93
      %p95 = scmp.ne.s32.totalorder %s87, %s89
      %p96 = scmp.eq.s32.totalorder %s23, 3
      %p97 = por %p95, %p96
      %p98 = scmp.ne.s32.totalorder %s89, %s90
      %p99 = scmp.eq.s32.totalorder %s23, 0
      %p100 = por %p98, %p99
      %p101 = scmp.ne.s32.totalorder %s89, %s90
      %p102 = scmp.eq.s32.totalorder %s24, 3
      %p103 = por %p101, %p102
      %p105 = scmp.ne.s32.totalorder %s90, %s104
      %p106 = scmp.eq.s32.totalorder %s24, 0
      %p107 = por %p105, %p106
      %s109 = sadd.s32 %s108, 1
      %p112 = scmp.eq.s32.totalorder %s18, 3
      %p113 = scmp.ne.s32.totalorder %s108, %s110
      %p114 = scmp.eq.s32.totalorder %s18, 0
      %p115 = por %p113, %p114
      %p116 = scmp.ne.s32.totalorder %s108, %s110
      %p117 = scmp.eq.s32.totalorder %s23, 3
      %p118 = por %p116, %p117
      %p119 = scmp.ne.s32.totalorder %s110, %s111
      %p120 = scmp.eq.s32.totalorder %s23, 0
      %p121 = por %p119, %p120
      %p122 = scmp.ne.s32.totalorder %s110, %s111
      %p123 = scmp.eq.s32.totalorder %s24, 3
      %p124 = por %p122, %p123
      %p126 = scmp.ne.s32.totalorder %s111, %s125
      %p127 = scmp.eq.s32.totalorder %s24, 0
      %p128 = por %p126, %p127
      %s130 = sadd.s32 %s129, 1
      %p133 = scmp.eq.s32.totalorder %s18, 3
      %p134 = scmp.ne.s32.totalorder %s129, %s131
      %p135 = scmp.eq.s32.totalorder %s18, 0
      %p136 = por %p134, %p135
      %p137 = scmp.ne.s32.totalorder %s129, %s131
      %p138 = scmp.eq.s32.totalorder %s23, 3
      %p139 = por %p137, %p138
      %p140 = scmp.ne.s32.totalorder %s131, %s132
      %p141 = scmp.eq.s32.totalorder %s23, 0
      %p142 = por %p140, %p141
      %p143 = scmp.ne.s32.totalorder %s131, %s132
      %p144 = scmp.eq.s32.totalorder %s24, 3
      %p145 = por %p143, %p144
      %p147 = scmp.ne.s32.totalorder %s132, %s146
      %p148 = scmp.eq.s32.totalorder %s24, 0
      %p149 = por %p147, %p148
      %s150 = ssub.s32 %s25, %s37
      %s151 = ssub.s32 %s26, %s33
      %s152 = sor.u32 %s150, %s151
      %p153 = scmp.eq.s32.totalorder %s152, 0
      %s155 = sadd.s32 %s154, 1
      %s156 = scalar_select %p153, %s154, %s155
      %p159 = pneg %p153
      %p160 = scmp.eq.s32.totalorder %s18, 3
      %p161 = por %p159, %p160
      %p162 = scmp.ne.s32.totalorder %s154, %s157
      %p163 = scmp.eq.s32.totalorder %s18, 0
      %p164 = por %p162, %p163
      %p165 = scmp.ne.s32.totalorder %s154, %s157
      %p166 = scmp.eq.s32.totalorder %s23, 3
      %p167 = por %p165, %p166
      %p168 = scmp.ne.s32.totalorder %s157, %s158
      %p169 = scmp.eq.s32.totalorder %s23, 0
      %p170 = por %p168, %p169
      %p171 = scmp.ne.s32.totalorder %s157, %s158
      %p172 = scmp.eq.s32.totalorder %s24, 3
      %p173 = por %p171, %p172
      %p175 = scmp.ne.s32.totalorder %s158, %s174
      %p176 = scmp.eq.s32.totalorder %s24, 0
      %p177 = por %p175, %p176
      %p178 = scmp.le.s32.totalorder 1, %s18
      %p179 = scmp.lt.s32.totalorder %s18, 5
      %p180 = pnand %p178, %p179
      %p181 = pneg %p180
      // Predicated region
      $region9: #{tpu_custom_call.1} parent=5 // pred_check
        _
      $region10: #{tpu_custom_call.1} parent=5 // pred_check_branch
        %183 = sbr.rel (%p180) target = $region12
      $region11: #{tpu_custom_call.1} parent=5 // pred_region
        %s184 = ssub.s32 %s18, 1
        // Predicated region
        $region13: #{tpu_custom_call.1} parent=11 // pred_check
          %p185 = pneg %p79
        $region14: #{tpu_custom_call.1} parent=11 // pred_check_branch
          %187 = sbr.rel (%p185) target = $region16
        $region15: #{tpu_custom_call.1} parent=11 // pred_region
          _
        $region16: #{tpu_custom_call.1} parent=11 // pred_fallthru
          _
        // Predicated region
        $region17: #{tpu_custom_call.1} parent=11 // pred_check
          %p188 = pneg %p100
        $region18: #{tpu_custom_call.1} parent=11 // pred_check_branch
          %190 = sbr.rel (%p188) target = $region20
        $region19: #{tpu_custom_call.1} parent=11 // pred_region
          _
        $region20: #{tpu_custom_call.1} parent=11 // pred_fallthru
          _
        // Predicated region
        $region21: #{tpu_custom_call.1} parent=11 // pred_check
          %p191 = pneg %p121
        $region22: #{tpu_custom_call.1} parent=11 // pred_check_branch
          %193 = sbr.rel (%p191) target = $region24
        $region23: #{tpu_custom_call.1} parent=11 // pred_region
          %s195 = ssub.s32 12288, 12288
          %196 = vsyncadd [#allocation6], %s195
          %s197 = sshll.u32 [#allocation5], 4
          %s198 = int_to_ptr.vmem [resolvable:$true] %s197
          %203 = dma.hbm_to_vmem [thread:$0]  %s3, 12288, %s198, [#allocation6], 384, 384, 24
        $region24: #{tpu_custom_call.1} parent=11 // pred_fallthru
          _
        // Predicated region
        $region25: #{tpu_custom_call.1} parent=11 // pred_check
          %p204 = pneg %p142
        $region26: #{tpu_custom_call.1} parent=11 // pred_check_branch
          %206 = sbr.rel (%p204) target = $region28
        $region27: #{tpu_custom_call.1} parent=11 // pred_region
          _
        $region28: #{tpu_custom_call.1} parent=11 // pred_fallthru
          _
      $region12: #{tpu_custom_call.1} parent=5 // pred_fallthru
        _
      %p207 = scmp.lt.s32.totalorder %s18, 4
      // Predicated region
      $region29: #{tpu_custom_call.1} parent=5 // pred_check
        %p208 = pneg %p207
      $region30: #{tpu_custom_call.1} parent=5 // pred_check_branch
        %210 = sbr.rel (%p208) target = $region32
      $region31: #{tpu_custom_call.1} parent=5 // pred_region
        // Predicated region
        $region33: #{tpu_custom_call.1} parent=31 // pred_check
          %p211 = pneg %p52
        $region34: #{tpu_custom_call.1} parent=31 // pred_check_branch
          %213 = sbr.rel (%p211) target = $region36
        $region35: #{tpu_custom_call.1} parent=31 // pred_region
          %s214 = sand.u32 %s42, 1
          %s215 = scalar_lea.sflag [#allocation3], %s214
          %s216 = sand.u32 %s42, 1
          %s217 = smul.addr %s216, 32
          %s218 = scalar_lea.vmem [#allocation2], %s217
          %s219 = smul.u32 2, %s26
          %s221 = ssub.s32 512, 512
          %222 = vsyncadd %s215, %s221
          %s223 = smul.addr %s219, 2
          %s224 = smul.addr %s25, 8
          %s225 = sadd.s32 %s223, %s224
          %s226 = smul.addr %s225, 128
          %s227 = scalar_lea.hbm %s0, %s226
          %s228 = sshll.u32 %s218, 4
          %s229 = int_to_ptr.vmem [resolvable:$true] %s228
          %234 = dma.hbm_to_vmem [thread:$0]  %s227, 512, %s229, %s215, 256, 256, 16
        $region36: #{tpu_custom_call.1} parent=31 // pred_fallthru
          _
      $region32: #{tpu_custom_call.1} parent=5 // pred_fallthru
        _
      %p235 = scmp.le.s32.totalorder 1, %s18
      %p236 = scmp.lt.s32.totalorder %s18, 5
      %p237 = pnand %p235, %p236
      %p238 = pneg %p237
      // Predicated region
      $region37: #{tpu_custom_call.1} parent=5 // pred_check
        _
      $region38: #{tpu_custom_call.1} parent=5 // pred_check_branch
        %240 = sbr.rel (%p237) target = $region40
      $region39: #{tpu_custom_call.1} parent=5 // pred_region
        %s241 = ssub.s32 %s18, 1
        %s242 = sand.u32 %s45, 1
        %s243 = scalar_lea.sflag [#allocation3], %s242
        %s244 = sand.u32 %s45, 1
        %s245 = smul.addr %s244, 32
        %s246 = scalar_lea.vmem [#allocation2], %s245
        // Predicated region
        $region41: #{tpu_custom_call.1} parent=39 // pred_check
          %p247 = pneg %p58
        $region42: #{tpu_custom_call.1} parent=39 // pred_check_branch
          %249 = sbr.rel (%p247) target = $region44
        $region43: #{tpu_custom_call.1} parent=39 // pred_region
          %250 = dma.done %s243, 512
        $region44: #{tpu_custom_call.1} parent=39 // pred_fallthru
          _
        // Predicated region
        $region45: #{tpu_custom_call.1} parent=39 // pred_check
          %p251 = pneg %p121
        $region46: #{tpu_custom_call.1} parent=39 // pred_check_branch
          %253 = sbr.rel (%p251) target = $region48
        $region47: #{tpu_custom_call.1} parent=39 // pred_region
          %254 = dma.done [#allocation6], 12288
        $region48: #{tpu_custom_call.1} parent=39 // pred_fallthru
          _
        %s255 = sand.u32 %s45, 1
        %s256 = scalar_lea.sflag [#allocation3], %s255
        %s257 = sand.u32 %s45, 1
        %s258 = smul.addr %s257, 32
        %s259 = scalar_lea.vmem [#allocation2], %s258
        %p260 = pneg %p58
        %p261 = pneg %p55
        %p262 = pneg %p79
        %p263 = pneg %p76
        %p264 = pneg %p100
        %p265 = pneg %p97
        %p266 = pneg %p121
        %p267 = pneg %p118
        %p268 = pneg %p142
        %p269 = pneg %p139
        %p270 = pneg %p170
        %p271 = pneg %p167
        %s272 = sand.u32 %s157, 1
        %s273 = scalar_lea.sflag [#allocation4], %s272
        %s274 = sand.u32 %s157, 1
        %s275 = smul.addr %s274, 48
        %s276 = scalar_lea.vmem [#allocation7], %s275
        %s277 = smul.u32 2, %s28
        %s278 = smul.u32 2, %s28
        %v279 = vld [vmem:[%s246] sm:$0xff]
        %v280 = vld [vmem:[%s246 + $0x8] sm:$0xff]
        %v281 = vld [vmem:[%s246 + $0x10] sm:$0xff]
        %v282 = vld [vmem:[%s246 + $0x18] sm:$0xff]
        %v283 = vadd.f32 %v279, %v280
        %284 = vadd.xlane.f32.xlu0 %v283
        %v285 = vpop.xlane.xlu0 %284
        %v286 = vadd.f32 %v281, %v282
        %287 = vadd.xlane.f32.xlu0 %v286
        %v288 = vpop.xlane.xlu0 %287
        %v289 = vrcp.pop 256.0
        %v290 = vmul.f32 %v285, %v289
        %v291 = vmul.f32 %v288, %v289
        %v292 = vsub.f32 %v279, %v290
        %v293 = vsub.f32 %v280, %v290
        %v294 = vsub.f32 %v281, %v291
        %v295 = vsub.f32 %v282, %v291
        %v296 = vmul.f32 %v292, %v292
        %v297 = vmul.f32 %v293, %v293
        %v298 = vmul.f32 %v294, %v294
        %v299 = vmul.f32 %v295, %v295
        %v300 = vadd.f32 %v296, %v297
        %301 = vadd.xlane.f32.xlu0 %v300
        %v302 = vpop.xlane.xlu0 %301
        %v303 = vadd.f32 %v298, %v299
        %304 = vadd.xlane.f32.xlu0 %v303
        %v305 = vpop.xlane.xlu0 %304
        %v306 = vmul.f32 %v302, %v289
        %v307 = vmul.f32 %v305, %v289
        %v308 = vld [vmem:[%s1] sm:$0x3]
        %v309 = vadd.f32 %v306, 1e-12
        %v310 = vadd.f32 %v307, 1e-12
        %v311 = vrsqrt.pop %v309
        %v312 = vrsqrt.pop %v310
        %v313 = vmul.f32 %v292, %v311
        %v314 = vmul.f32 %v293, %v311
        %v315 = vmul.f32 %v294, %v312
        %v316 = vmul.f32 %v295, %v312
        %v318 = vlaneseq
        %v319 = vshrl.u32 %v318, 7
        %v320 = vsub.s32 0, %v319
        %v321 = vrot.slane %v308, %v320
        %v322 = vlaneseq
        %v323 = vshrl.u32 %v322, 7
        %v324 = vsub.s32 1, %v323
        %v325 = vrot.slane %v308, %v324
        %v328 = vmul.f32 %v321, %v313
        %v329 = vmul.f32 %v325, %v314
        %v330 = vmul.f32 %v321, %v315
        %v331 = vmul.f32 %v325, %v316
        %v332 = vld [vmem:[%s2] sm:$0x3]
        %v334 = vlaneseq
        %v335 = vshrl.u32 %v334, 7
        %v336 = vsub.s32 0, %v335
        %v337 = vrot.slane %v332, %v336
        %v338 = vlaneseq
        %v339 = vshrl.u32 %v338, 7
        %v340 = vsub.s32 1, %v339
        %v341 = vrot.slane %v332, %v340
        %v344 = vadd.f32 %v328, %v337
        %v345 = vadd.f32 %v329, %v341
        %v346 = vadd.f32 %v330, %v337
        %v347 = vadd.f32 %v331, %v341
        %v348 = vpack.c.bf16 %v346, %v344
        %v349 = vpack.c.bf16 %v347, %v345
        %v350 = vld [vmem:[#allocation5] sm:$0xff]
        %v351 = vld [vmem:[#allocation5 + $0x8] sm:$0xff]
        %v352 = vld [vmem:[#allocation5 + $0x10] sm:$0xff]
        %v353 = vld [vmem:[#allocation5 + $0x18] sm:$0xff]
        %v354 = vld [vmem:[#allocation5 + $0x20] sm:$0xff]
        %v355 = vld [vmem:[#allocation5 + $0x28] sm:$0xff]
        %v356 = vld [vmem:[#allocation5 + $0x30] sm:$0xff]
        %v357 = vld [vmem:[#allocation5 + $0x38] sm:$0xff]
        %v358 = vld [vmem:[#allocation5 + $0x40] sm:$0xff]
        %v359 = vld [vmem:[#allocation5 + $0x48] sm:$0xff]
        %v360 = vld [vmem:[#allocation5 + $0x50] sm:$0xff]
        %v361 = vld [vmem:[#allocation5 + $0x58] sm:$0xff]
        %v362 = vld [vmem:[#allocation5 + $0x60] sm:$0xff]
        %v363 = vld [vmem:[#allocation5 + $0x68] sm:$0xff]
        %v364 = vld [vmem:[#allocation5 + $0x70] sm:$0xff]
        %v365 = vld [vmem:[#allocation5 + $0x78] sm:$0xff]
        %v366 = vld [vmem:[#allocation5 + $0x80] sm:$0xff]
        %v367 = vld [vmem:[#allocation5 + $0x88] sm:$0xff]
        %v368 = vld [vmem:[#allocation5 + $0x90] sm:$0xff]
        %v369 = vld [vmem:[#allocation5 + $0x98] sm:$0xff]
        %v370 = vld [vmem:[#allocation5 + $0xa0] sm:$0xff]
        %v371 = vld [vmem:[#allocation5 + $0xa8] sm:$0xff]
        %v372 = vld [vmem:[#allocation5 + $0xb0] sm:$0xff]
        %v373 = vld [vmem:[#allocation5 + $0xb8] sm:$0xff]
        %v374 = vld [vmem:[#allocation5 + $0xc0] sm:$0xff]
        %v375 = vld [vmem:[#allocation5 + $0xc8] sm:$0xff]
        %v376 = vld [vmem:[#allocation5 + $0xd0] sm:$0xff]
        %v377 = vld [vmem:[#allocation5 + $0xd8] sm:$0xff]
        %v378 = vld [vmem:[#allocation5 + $0xe0] sm:$0xff]
        %v379 = vld [vmem:[#allocation5 + $0xe8] sm:$0xff]
        %v380 = vld [vmem:[#allocation5 + $0xf0] sm:$0xff]
        %v381 = vld [vmem:[#allocation5 + $0xf8] sm:$0xff]
        %v382 = vld [vmem:[#allocation5 + $0x100] sm:$0xff]
        %v383 = vld [vmem:[#allocation5 + $0x108] sm:$0xff]
        %v384 = vld [vmem:[#allocation5 + $0x110] sm:$0xff]
        %v385 = vld [vmem:[#allocation5 + $0x118] sm:$0xff]
        %v386 = vld [vmem:[#allocation5 + $0x120] sm:$0xff]
        %v387 = vld [vmem:[#allocation5 + $0x128] sm:$0xff]
        %v388 = vld [vmem:[#allocation5 + $0x130] sm:$0xff]
        %v389 = vld [vmem:[#allocation5 + $0x138] sm:$0xff]
        %v390 = vld [vmem:[#allocation5 + $0x140] sm:$0xff]
        %v391 = vld [vmem:[#allocation5 + $0x148] sm:$0xff]
        %v392 = vld [vmem:[#allocation5 + $0x150] sm:$0xff]
        %v393 = vld [vmem:[#allocation5 + $0x158] sm:$0xff]
        %v394 = vld [vmem:[#allocation5 + $0x160] sm:$0xff]
        %v395 = vld [vmem:[#allocation5 + $0x168] sm:$0xff]
        %v396 = vld [vmem:[#allocation5 + $0x170] sm:$0xff]
        %v397 = vld [vmem:[#allocation5 + $0x178] sm:$0xff]
        %v398 = vld [vmem:[#allocation5 + $0x180] sm:$0xff]
        %v399 = vld [vmem:[#allocation5 + $0x188] sm:$0xff]
        %v400 = vld [vmem:[#allocation5 + $0x190] sm:$0xff]
        %v401 = vld [vmem:[#allocation5 + $0x198] sm:$0xff]
        %v402 = vld [vmem:[#allocation5 + $0x1a0] sm:$0xff]
        %v403 = vld [vmem:[#allocation5 + $0x1a8] sm:$0xff]
        %v404 = vld [vmem:[#allocation5 + $0x1b0] sm:$0xff]
        %v405 = vld [vmem:[#allocation5 + $0x1b8] sm:$0xff]
        %v406 = vld [vmem:[#allocation5 + $0x1c0] sm:$0xff]
        %v407 = vld [vmem:[#allocation5 + $0x1c8] sm:$0xff]
        %v408 = vld [vmem:[#allocation5 + $0x1d0] sm:$0xff]
        %v409 = vld [vmem:[#allocation5 + $0x1d8] sm:$0xff]
        %v410 = vld [vmem:[#allocation5 + $0x1e0] sm:$0xff]
        %v411 = vld [vmem:[#allocation5 + $0x1e8] sm:$0xff]
        %v412 = vld [vmem:[#allocation5 + $0x1f0] sm:$0xff]
        %v413 = vld [vmem:[#allocation5 + $0x1f8] sm:$0xff]
        %v414 = vld [vmem:[#allocation5 + $0x200] sm:$0xff]
        %v415 = vld [vmem:[#allocation5 + $0x208] sm:$0xff]
        %v416 = vld [vmem:[#allocation5 + $0x210] sm:$0xff]
        %v417 = vld [vmem:[#allocation5 + $0x218] sm:$0xff]
        %v418 = vld [vmem:[#allocation5 + $0x220] sm:$0xff]
        %v419 = vld [vmem:[#allocation5 + $0x228] sm:$0xff]
        %v420 = vld [vmem:[#allocation5 + $0x230] sm:$0xff]
        %v421 = vld [vmem:[#allocation5 + $0x238] sm:$0xff]
        %v422 = vld [vmem:[#allocation5 + $0x240] sm:$0xff]
        %v423 = vld [vmem:[#allocation5 + $0x248] sm:$0xff]
        %v424 = vld [vmem:[#allocation5 + $0x250] sm:$0xff]
        %v425 = vld [vmem:[#allocation5 + $0x258] sm:$0xff]
        %v426 = vld [vmem:[#allocation5 + $0x260] sm:$0xff]
        %v427 = vld [vmem:[#allocation5 + $0x268] sm:$0xff]
        %v428 = vld [vmem:[#allocation5 + $0x270] sm:$0xff]
        %v429 = vld [vmem:[#allocation5 + $0x278] sm:$0xff]
        %v430 = vld [vmem:[#allocation5 + $0x280] sm:$0xff]
        %v431 = vld [vmem:[#allocation5 + $0x288] sm:$0xff]
        %v432 = vld [vmem:[#allocation5 + $0x290] sm:$0xff]
        %v433 = vld [vmem:[#allocation5 + $0x298] sm:$0xff]
        %v434 = vld [vmem:[#allocation5 + $0x2a0] sm:$0xff]
        %v435 = vld [vmem:[#allocation5 + $0x2a8] sm:$0xff]
        %v436 = vld [vmem:[#allocation5 + $0x2b0] sm:$0xff]
        %v437 = vld [vmem:[#allocation5 + $0x2b8] sm:$0xff]
        %v438 = vld [vmem:[#allocation5 + $0x2c0] sm:$0xff]
        %v439 = vld [vmem:[#allocation5 + $0x2c8] sm:$0xff]
        %v440 = vld [vmem:[#allocation5 + $0x2d0] sm:$0xff]
        %v441 = vld [vmem:[#allocation5 + $0x2d8] sm:$0xff]
        %v442 = vld [vmem:[#allocation5 + $0x2e0] sm:$0xff]
        %v443 = vld [vmem:[#allocation5 + $0x2e8] sm:$0xff]
        %v444 = vld [vmem:[#allocation5 + $0x2f0] sm:$0xff]
        %v445 = vld [vmem:[#allocation5 + $0x2f8] sm:$0xff]
        %v446 = vld [vmem:[%s4] sm:$0x3f]
        %v448 = vlaneseq
        %v449 = vshrl.u32 %v448, 7
        %v450 = vsub.s32 0, %v449
        %v451 = vrot.slane %v446, %v450
        %v452 = vlaneseq
        %v453 = vshrl.u32 %v452, 7
        %v454 = vsub.s32 1, %v453
        %v455 = vrot.slane %v446, %v454
        %v456 = vlaneseq
        %v457 = vshrl.u32 %v456, 7
        %v458 = vsub.s32 2, %v457
        %v459 = vrot.slane %v446, %v458
        %v460 = vlaneseq
        %v461 = vshrl.u32 %v460, 7
        %v462 = vsub.s32 3, %v461
        %v463 = vrot.slane %v446, %v462
        %v464 = vlaneseq
        %v465 = vshrl.u32 %v464, 7
        %v466 = vsub.s32 4, %v465
        %v467 = vrot.slane %v446, %v466
        %v468 = vlaneseq
        %v469 = vshrl.u32 %v468, 7
        %v470 = vsub.s32 5, %v469
        %v471 = vrot.slane %v446, %v470
        %v574 = vunpack.c.l.b16 %v350
        %v575 = vunpack.c.h.b16 %v350
        %v576 = vunpack.c.l.b16 %v351
        %v577 = vunpack.c.h.b16 %v351
        %v578 = vunpack.c.l.b16 %v352
        %v579 = vunpack.c.h.b16 %v352
        %v580 = vunpack.c.l.b16 %v353
        %v581 = vunpack.c.h.b16 %v353
        %v582 = vunpack.c.l.b16 %v354
        %v583 = vunpack.c.h.b16 %v354
        %v584 = vunpack.c.l.b16 %v355
        %v585 = vunpack.c.h.b16 %v355
        %v586 = vunpack.c.l.b16 %v356
        %v587 = vunpack.c.h.b16 %v356
        %v588 = vunpack.c.l.b16 %v357
        %v589 = vunpack.c.h.b16 %v357
        %v590 = vunpack.c.l.b16 %v358
        %v591 = vunpack.c.h.b16 %v358
        %v592 = vunpack.c.l.b16 %v359
        %v593 = vunpack.c.h.b16 %v359
        %v594 = vunpack.c.l.b16 %v360
        %v595 = vunpack.c.h.b16 %v360
        %v596 = vunpack.c.l.b16 %v361
        %v597 = vunpack.c.h.b16 %v361
        %v598 = vunpack.c.l.b16 %v362
        %v599 = vunpack.c.h.b16 %v362
        %v600 = vunpack.c.l.b16 %v363
        %v601 = vunpack.c.h.b16 %v363
        %v602 = vunpack.c.l.b16 %v364
        %v603 = vunpack.c.h.b16 %v364
        %v604 = vunpack.c.l.b16 %v365
        %v605 = vunpack.c.h.b16 %v365
        %v606 = vunpack.c.l.b16 %v366
        %v607 = vunpack.c.h.b16 %v366
        %v608 = vunpack.c.l.b16 %v367
        %v609 = vunpack.c.h.b16 %v367
        %v610 = vunpack.c.l.b16 %v368
        %v611 = vunpack.c.h.b16 %v368
        %v612 = vunpack.c.l.b16 %v369
        %v613 = vunpack.c.h.b16 %v369
        %v614 = vunpack.c.l.b16 %v370
        %v615 = vunpack.c.h.b16 %v370
        %v616 = vunpack.c.l.b16 %v371
        %v617 = vunpack.c.h.b16 %v371
        %v618 = vunpack.c.l.b16 %v372
        %v619 = vunpack.c.h.b16 %v372
        %v620 = vunpack.c.l.b16 %v373
        %v621 = vunpack.c.h.b16 %v373
        %v622 = vunpack.c.l.b16 %v374
        %v623 = vunpack.c.h.b16 %v374
        %v624 = vunpack.c.l.b16 %v375
        %v625 = vunpack.c.h.b16 %v375
        %v626 = vunpack.c.l.b16 %v376
        %v627 = vunpack.c.h.b16 %v376
        %v628 = vunpack.c.l.b16 %v377
        %v629 = vunpack.c.h.b16 %v377
        %v630 = vunpack.c.l.b16 %v378
        %v631 = vunpack.c.h.b16 %v378
        %v632 = vunpack.c.l.b16 %v379
        %v633 = vunpack.c.h.b16 %v379
        %v634 = vunpack.c.l.b16 %v380
        %v635 = vunpack.c.h.b16 %v380
        %v636 = vunpack.c.l.b16 %v381
        %v637 = vunpack.c.h.b16 %v381
        %v638 = vunpack.c.l.b16 %v382
        %v639 = vunpack.c.h.b16 %v382
        %v640 = vunpack.c.l.b16 %v383
        %v641 = vunpack.c.h.b16 %v383
        %v642 = vunpack.c.l.b16 %v384
        %v643 = vunpack.c.h.b16 %v384
        %v644 = vunpack.c.l.b16 %v385
        %v645 = vunpack.c.h.b16 %v385
        %v646 = vunpack.c.l.b16 %v386
        %v647 = vunpack.c.h.b16 %v386
        %v648 = vunpack.c.l.b16 %v387
        %v649 = vunpack.c.h.b16 %v387
        %v650 = vunpack.c.l.b16 %v388
        %v651 = vunpack.c.h.b16 %v388
        %v652 = vunpack.c.l.b16 %v389
        %v653 = vunpack.c.h.b16 %v389
        %v654 = vunpack.c.l.b16 %v390
        %v655 = vunpack.c.h.b16 %v390
        %v656 = vunpack.c.l.b16 %v391
        %v657 = vunpack.c.h.b16 %v391
        %v658 = vunpack.c.l.b16 %v392
        %v659 = vunpack.c.h.b16 %v392
        %v660 = vunpack.c.l.b16 %v393
        %v661 = vunpack.c.h.b16 %v393
        %v662 = vunpack.c.l.b16 %v394
        %v663 = vunpack.c.h.b16 %v394
        %v664 = vunpack.c.l.b16 %v395
        %v665 = vunpack.c.h.b16 %v395
        %v666 = vunpack.c.l.b16 %v396
        %v667 = vunpack.c.h.b16 %v396
        %v668 = vunpack.c.l.b16 %v397
        %v669 = vunpack.c.h.b16 %v397
        %v670 = vunpack.c.l.b16 %v398
        %v671 = vunpack.c.h.b16 %v398
        %v672 = vunpack.c.l.b16 %v399
        %v673 = vunpack.c.h.b16 %v399
        %v674 = vunpack.c.l.b16 %v400
        %v675 = vunpack.c.h.b16 %v400
        %v676 = vunpack.c.l.b16 %v401
        %v677 = vunpack.c.h.b16 %v401
        %v678 = vunpack.c.l.b16 %v402
        %v679 = vunpack.c.h.b16 %v402
        %v680 = vunpack.c.l.b16 %v403
        %v681 = vunpack.c.h.b16 %v403
        %v682 = vunpack.c.l.b16 %v404
        %v683 = vunpack.c.h.b16 %v404
        %v684 = vunpack.c.l.b16 %v405
        %v685 = vunpack.c.h.b16 %v405
        %v686 = vunpack.c.l.b16 %v406
        %v687 = vunpack.c.h.b16 %v406
        %v688 = vunpack.c.l.b16 %v407
        %v689 = vunpack.c.h.b16 %v407
        %v690 = vunpack.c.l.b16 %v408
        %v691 = vunpack.c.h.b16 %v408
        %v692 = vunpack.c.l.b16 %v409
        %v693 = vunpack.c.h.b16 %v409
        %v694 = vunpack.c.l.b16 %v410
        %v695 = vunpack.c.h.b16 %v410
        %v696 = vunpack.c.l.b16 %v411
        %v697 = vunpack.c.h.b16 %v411
        %v698 = vunpack.c.l.b16 %v412
        %v699 = vunpack.c.h.b16 %v412
        %v700 = vunpack.c.l.b16 %v413
        %v701 = vunpack.c.h.b16 %v413
        %v702 = vunpack.c.l.b16 %v414
        %v703 = vunpack.c.h.b16 %v414
        %v704 = vunpack.c.l.b16 %v415
        %v705 = vunpack.c.h.b16 %v415
        %v706 = vunpack.c.l.b16 %v416
        %v707 = vunpack.c.h.b16 %v416
        %v708 = vunpack.c.l.b16 %v417
        %v709 = vunpack.c.h.b16 %v417
        %v710 = vunpack.c.l.b16 %v418
        %v711 = vunpack.c.h.b16 %v418
        %v712 = vunpack.c.l.b16 %v419
        %v713 = vunpack.c.h.b16 %v419
        %v714 = vunpack.c.l.b16 %v420
        %v715 = vunpack.c.h.b16 %v420
        %v716 = vunpack.c.l.b16 %v421
        %v717 = vunpack.c.h.b16 %v421
        %v718 = vunpack.c.l.b16 %v422
        %v719 = vunpack.c.h.b16 %v422
        %v720 = vunpack.c.l.b16 %v423
        %v721 = vunpack.c.h.b16 %v423
        %v722 = vunpack.c.l.b16 %v424
        %v723 = vunpack.c.h.b16 %v424
        %v724 = vunpack.c.l.b16 %v425
        %v725 = vunpack.c.h.b16 %v425
        %v726 = vunpack.c.l.b16 %v426
        %v727 = vunpack.c.h.b16 %v426
        %v728 = vunpack.c.l.b16 %v427
        %v729 = vunpack.c.h.b16 %v427
        %v730 = vunpack.c.l.b16 %v428
        %v731 = vunpack.c.h.b16 %v428
        %v732 = vunpack.c.l.b16 %v429
        %v733 = vunpack.c.h.b16 %v429
        %v734 = vunpack.c.l.b16 %v430
        %v735 = vunpack.c.h.b16 %v430
        %v736 = vunpack.c.l.b16 %v431
        %v737 = vunpack.c.h.b16 %v431
        %v738 = vunpack.c.l.b16 %v432
        %v739 = vunpack.c.h.b16 %v432
        %v740 = vunpack.c.l.b16 %v433
        %v741 = vunpack.c.h.b16 %v433
        %v742 = vunpack.c.l.b16 %v434
        %v743 = vunpack.c.h.b16 %v434
        %v744 = vunpack.c.l.b16 %v435
        %v745 = vunpack.c.h.b16 %v435
        %v746 = vunpack.c.l.b16 %v436
        %v747 = vunpack.c.h.b16 %v436
        %v748 = vunpack.c.l.b16 %v437
        %v749 = vunpack.c.h.b16 %v437
        %v750 = vunpack.c.l.b16 %v438
        %v751 = vunpack.c.h.b16 %v438
        %v752 = vunpack.c.l.b16 %v439
        %v753 = vunpack.c.h.b16 %v439
        %v754 = vunpack.c.l.b16 %v440
        %v755 = vunpack.c.h.b16 %v440
        %v756 = vunpack.c.l.b16 %v441
        %v757 = vunpack.c.h.b16 %v441
        %v758 = vunpack.c.l.b16 %v442
        %v759 = vunpack.c.h.b16 %v442
        %v760 = vunpack.c.l.b16 %v443
        %v761 = vunpack.c.h.b16 %v443
        %v762 = vunpack.c.l.b16 %v444
        %v763 = vunpack.c.h.b16 %v444
        %v764 = vunpack.c.l.b16 %v445
        %v765 = vunpack.c.h.b16 %v445
        %v766 = vpack.c.b16 %v580, %v574
        %v767 = vpack.c.b16 %v581, %v575
        %v768 = vpack.c.b16 %v582, %v576
        %v769 = vpack.c.b16 %v583, %v577
        %v770 = vpack.c.b16 %v584, %v578
        %v771 = vpack.c.b16 %v585, %v579
        %v772 = vpack.c.b16 %v592, %v586
        %v773 = vpack.c.b16 %v593, %v587
        %v774 = vpack.c.b16 %v594, %v588
        %v775 = vpack.c.b16 %v595, %v589
        %v776 = vpack.c.b16 %v596, %v590
        %v777 = vpack.c.b16 %v597, %v591
        %v778 = vpack.c.b16 %v604, %v598
        %v779 = vpack.c.b16 %v605, %v599
        %v780 = vpack.c.b16 %v606, %v600
        %v781 = vpack.c.b16 %v607, %v601
        %v782 = vpack.c.b16 %v608, %v602
        %v783 = vpack.c.b16 %v609, %v603
        %v784 = vpack.c.b16 %v616, %v610
        %v785 = vpack.c.b16 %v617, %v611
        %v786 = vpack.c.b16 %v618, %v612
        %v787 = vpack.c.b16 %v619, %v613
        %v788 = vpack.c.b16 %v620, %v614
        %v789 = vpack.c.b16 %v621, %v615
        %v790 = vpack.c.b16 %v628, %v622
        %v791 = vpack.c.b16 %v629, %v623
        %v792 = vpack.c.b16 %v630, %v624
        %v793 = vpack.c.b16 %v631, %v625
        %v794 = vpack.c.b16 %v632, %v626
        %v795 = vpack.c.b16 %v633, %v627
        %v796 = vpack.c.b16 %v640, %v634
        %v797 = vpack.c.b16 %v641, %v635
        %v798 = vpack.c.b16 %v642, %v636
        %v799 = vpack.c.b16 %v643, %v637
        %v800 = vpack.c.b16 %v644, %v638
        %v801 = vpack.c.b16 %v645, %v639
        %v802 = vpack.c.b16 %v652, %v646
        %v803 = vpack.c.b16 %v653, %v647
        %v804 = vpack.c.b16 %v654, %v648
        %v805 = vpack.c.b16 %v655, %v649
        %v806 = vpack.c.b16 %v656, %v650
        %v807 = vpack.c.b16 %v657, %v651
        %v808 = vpack.c.b16 %v664, %v658
        %v809 = vpack.c.b16 %v665, %v659
        %v810 = vpack.c.b16 %v666, %v660
        %v811 = vpack.c.b16 %v667, %v661
        %v812 = vpack.c.b16 %v668, %v662
        %v813 = vpack.c.b16 %v669, %v663
        %v814 = vpack.c.b16 %v676, %v670
        %v815 = vpack.c.b16 %v677, %v671
        %v816 = vpack.c.b16 %v678, %v672
        %v817 = vpack.c.b16 %v679, %v673
        %v818 = vpack.c.b16 %v680, %v674
        %v819 = vpack.c.b16 %v681, %v675
        %v820 = vpack.c.b16 %v688, %v682
        %v821 = vpack.c.b16 %v689, %v683
        %v822 = vpack.c.b16 %v690, %v684
        %v823 = vpack.c.b16 %v691, %v685
        %v824 = vpack.c.b16 %v692, %v686
        %v825 = vpack.c.b16 %v693, %v687
        %v826 = vpack.c.b16 %v700, %v694
        %v827 = vpack.c.b16 %v701, %v695
        %v828 = vpack.c.b16 %v702, %v696
        %v829 = vpack.c.b16 %v703, %v697
        %v830 = vpack.c.b16 %v704, %v698
        %v831 = vpack.c.b16 %v705, %v699
        %v832 = vpack.c.b16 %v712, %v706
        %v833 = vpack.c.b16 %v713, %v707
        %v834 = vpack.c.b16 %v714, %v708
        %v835 = vpack.c.b16 %v715, %v709
        %v836 = vpack.c.b16 %v716, %v710
        %v837 = vpack.c.b16 %v717, %v711
        %v838 = vpack.c.b16 %v724, %v718
        %v839 = vpack.c.b16 %v725, %v719
        %v840 = vpack.c.b16 %v726, %v720
        %v841 = vpack.c.b16 %v727, %v721
        %v842 = vpack.c.b16 %v728, %v722
        %v843 = vpack.c.b16 %v729, %v723
        %v844 = vpack.c.b16 %v736, %v730
        %v845 = vpack.c.b16 %v737, %v731
        %v846 = vpack.c.b16 %v738, %v732
        %v847 = vpack.c.b16 %v739, %v733
        %v848 = vpack.c.b16 %v740, %v734
        %v849 = vpack.c.b16 %v741, %v735
        %v850 = vpack.c.b16 %v748, %v742
        %v851 = vpack.c.b16 %v749, %v743
        %v852 = vpack.c.b16 %v750, %v744
        %v853 = vpack.c.b16 %v751, %v745
        %v854 = vpack.c.b16 %v752, %v746
        %v855 = vpack.c.b16 %v753, %v747
        %v856 = vpack.c.b16 %v760, %v754
        %v857 = vpack.c.b16 %v761, %v755
        %v858 = vpack.c.b16 %v762, %v756
        %v859 = vpack.c.b16 %v763, %v757
        %v860 = vpack.c.b16 %v764, %v758
        %v861 = vpack.c.b16 %v765, %v759
        %958 = vmatprep.subr.bf16.mxu0 %v767
        %959 = vmatpush1.bf16.msra.mxu0 %v766
        %960 = vmatprep.subr.bf16.mxu0 %v773
        %961 = vmatpush1.bf16.msra.mxu0 %v772
        %962 = vmatprep.subr.bf16.mxu0 %v779
        %963 = vmatpush1.bf16.msra.mxu0 %v778
        %964 = vmatprep.subr.bf16.mxu0 %v785
        %965 = vmatpush1.bf16.msra.mxu0 %v784
        %966 = vmatprep.subr.bf16.mxu0 %v791
        %967 = vmatpush1.bf16.msra.mxu0 %v790
        %968 = vmatprep.subr.bf16.mxu0 %v797
        %969 = vmatpush1.bf16.msra.mxu0 %v796
        %970 = vmatprep.subr.bf16.mxu0 %v803
        %971 = vmatpush1.bf16.msra.mxu0 %v802
        %972 = vmatprep.subr.bf16.mxu0 %v809
        %973 = vmatpush1.bf16.msra.mxu0 %v808
        %974 = vmatprep.subr.bf16.mxu0 %v815
        %975 = vmatpush1.bf16.msra.mxu0 %v814
        %976 = vmatprep.subr.bf16.mxu0 %v821
        %977 = vmatpush1.bf16.msra.mxu0 %v820
        %978 = vmatprep.subr.bf16.mxu0 %v827
        %979 = vmatpush1.bf16.msra.mxu0 %v826
        %980 = vmatprep.subr.bf16.mxu0 %v833
        %981 = vmatpush1.bf16.msra.mxu0 %v832
        %982 = vmatprep.subr.bf16.mxu0 %v839
        %983 = vmatpush1.bf16.msra.mxu0 %v838
        %984 = vmatprep.subr.bf16.mxu0 %v845
        %985 = vmatpush1.bf16.msra.mxu0 %v844
        %986 = vmatprep.subr.bf16.mxu0 %v851
        %987 = vmatpush1.bf16.msra.mxu0 %v850
        %988 = vmatprep.subr.bf16.mxu0 %v857
        %989 = vmatpush1.bf16.msra.mxu0 %v856
        %990 = vmatprep.mubr.bf16.mxu0 %v349
        %991 = vmatmul.mubr.bf16.gmra.mrb[0].mxu0 %v348
        %v992 = vpop.f32.mrb[0].mxu0
        %v993 = vadd.f32 %v451, %v992
        %v994 = vpop.f32.mrb[0].mxu0
        %v995 = vadd.f32 %v455, %v994
        %v996 = vpop.f32.mrb[0].mxu0
        %v997 = vadd.f32 %v451, %v996
        %v998 = vpop.f32.mrb[0].mxu0
        %v999 = vadd.f32 %v455, %v998
        %1000 = vdwg.mxu0
        %1001 = vmatprep.subr.bf16.mxu0 %v769
        %1002 = vmatpush1.bf16.msra.mxu0 %v768
        %1003 = vmatprep.subr.bf16.mxu0 %v775
        %1004 = vmatpush1.bf16.msra.mxu0 %v774
        %1005 = vmatprep.subr.bf16.mxu0 %v781
        %1006 = vmatpush1.bf16.msra.mxu0 %v780
        %1007 = vmatprep.subr.bf16.mxu0 %v787
        %1008 = vmatpush1.bf16.msra.mxu0 %v786
        %1009 = vmatprep.subr.bf16.mxu0 %v793
        %1010 = vmatpush1.bf16.msra.mxu0 %v792
        %1011 = vmatprep.subr.bf16.mxu0 %v799
        %1012 = vmatpush1.bf16.msra.mxu0 %v798
        %1013 = vmatprep.subr.bf16.mxu0 %v805
        %1014 = vmatpush1.bf16.msra.mxu0 %v804
        %1015 = vmatprep.subr.bf16.mxu0 %v811
        %1016 = vmatpush1.bf16.msra.mxu0 %v810
        %1017 = vmatprep.subr.bf16.mxu0 %v817
        %1018 = vmatpush1.bf16.msra.mxu0 %v816
        %1019 = vmatprep.subr.bf16.mxu0 %v823
        %1020 = vmatpush1.bf16.msra.mxu0 %v822
        %1021 = vmatprep.subr.bf16.mxu0 %v829
        %1022 = vmatpush1.bf16.msra.mxu0 %v828
        %1023 = vmatprep.subr.bf16.mxu0 %v835
        %1024 = vmatpush1.bf16.msra.mxu0 %v834
        %1025 = vmatprep.subr.bf16.mxu0 %v841
        %1026 = vmatpush1.bf16.msra.mxu0 %v840
        %1027 = vmatprep.subr.bf16.mxu0 %v847
        %1028 = vmatpush1.bf16.msra.mxu0 %v846
        %1029 = vmatprep.subr.bf16.mxu0 %v853
        %1030 = vmatpush1.bf16.msra.mxu0 %v852
        %1031 = vmatprep.subr.bf16.mxu0 %v859
        %1032 = vmatpush1.bf16.msra.mxu0 %v858
        %1033 = vmatprep.mubr.bf16.mxu0 %v349
        %1034 = vmatmul.mubr.bf16.gmra.mrb[0].mxu0 %v348
        %v1035 = vpop.f32.mrb[0].mxu0
        %v1036 = vadd.f32 %v459, %v1035
        %v1037 = vpop.f32.mrb[0].mxu0
        %v1038 = vadd.f32 %v463, %v1037
        %v1039 = vpop.f32.mrb[0].mxu0
        %v1040 = vadd.f32 %v459, %v1039
        %v1041 = vpop.f32.mrb[0].mxu0
        %v1042 = vadd.f32 %v463, %v1041
        %1043 = vdwg.mxu0
        %1044 = vmatprep.subr.bf16.mxu0 %v771
        %1045 = vmatpush1.bf16.msra.mxu0 %v770
        %1046 = vmatprep.subr.bf16.mxu0 %v777
        %1047 = vmatpush1.bf16.msra.mxu0 %v776
        %1048 = vmatprep.subr.bf16.mxu0 %v783
        %1049 = vmatpush1.bf16.msra.mxu0 %v782
        %1050 = vmatprep.subr.bf16.mxu0 %v789
        %1051 = vmatpush1.bf16.msra.mxu0 %v788
        %1052 = vmatprep.subr.bf16.mxu0 %v795
        %1053 = vmatpush1.bf16.msra.mxu0 %v794
        %1054 = vmatprep.subr.bf16.mxu0 %v801
        %1055 = vmatpush1.bf16.msra.mxu0 %v800
        %1056 = vmatprep.subr.bf16.mxu0 %v807
        %1057 = vmatpush1.bf16.msra.mxu0 %v806
        %1058 = vmatprep.subr.bf16.mxu0 %v813
        %1059 = vmatpush1.bf16.msra.mxu0 %v812
        %1060 = vmatprep.subr.bf16.mxu0 %v819
        %1061 = vmatpush1.bf16.msra.mxu0 %v818
        %1062 = vmatprep.subr.bf16.mxu0 %v825
        %1063 = vmatpush1.bf16.msra.mxu0 %v824
        %1064 = vmatprep.subr.bf16.mxu0 %v831
        %1065 = vmatpush1.bf16.msra.mxu0 %v830
        %1066 = vmatprep.subr.bf16.mxu0 %v837
        %1067 = vmatpush1.bf16.msra.mxu0 %v836
        %1068 = vmatprep.subr.bf16.mxu0 %v843
        %1069 = vmatpush1.bf16.msra.mxu0 %v842
        %1070 = vmatprep.subr.bf16.mxu0 %v849
        %1071 = vmatpush1.bf16.msra.mxu0 %v848
        %1072 = vmatprep.subr.bf16.mxu0 %v855
        %1073 = vmatpush1.bf16.msra.mxu0 %v854
        %1074 = vmatprep.subr.bf16.mxu0 %v861
        %1075 = vmatpush1.bf16.msra.mxu0 %v860
        %1076 = vmatprep.mubr.bf16.mxu0 %v349
        %1077 = vmatmul.mubr.bf16.gmra.mrb[0].mxu0 %v348
        %v1078 = vpop.f32.mrb[0].mxu0
        %v1079 = vadd.f32 %v467, %v1078
        %v1080 = vpop.f32.mrb[0].mxu0
        %v1081 = vadd.f32 %v471, %v1080
        %v1082 = vpop.f32.mrb[0].mxu0
        %v1083 = vadd.f32 %v467, %v1082
        %v1084 = vpop.f32.mrb[0].mxu0
        %v1085 = vadd.f32 %v471, %v1084
        %1086 = vdwg.mxu0
        %v1087 = vpack.c.bf16 %v997, %v993
        %v1088 = vpack.c.bf16 %v999, %v995
        %v1089 = vpack.c.bf16 %v1040, %v1036
        %v1090 = vpack.c.bf16 %v1042, %v1038
        %v1091 = vpack.c.bf16 %v1083, %v1079
        %v1092 = vpack.c.bf16 %v1085, %v1081
        %v1099 = vunpack.c.l.b16 %v1087
        %v1100 = vunpack.c.l.b16 %v1088
        %v1101 = vunpack.c.l.b16 %v1089
        %v1102 = vunpack.c.l.b16 %v1090
        %v1103 = vunpack.c.l.b16 %v1091
        %v1104 = vunpack.c.l.b16 %v1092
        %v1105 = vunpack.c.h.b16 %v1087
        %v1106 = vunpack.c.h.b16 %v1088
        %v1107 = vunpack.c.h.b16 %v1089
        %v1108 = vunpack.c.h.b16 %v1090
        %v1109 = vunpack.c.h.b16 %v1091
        %v1110 = vunpack.c.h.b16 %v1092
        %v1111 = vpack.c.b16 %v1100, %v1099
        %v1112 = vpack.c.b16 %v1102, %v1101
        %v1113 = vpack.c.b16 %v1104, %v1103
        %v1114 = vpack.c.b16 %v1106, %v1105
        %v1115 = vpack.c.b16 %v1108, %v1107
        %v1116 = vpack.c.b16 %v1110, %v1109
        %1123 = vst [vmem:[%s276] sm:$0xff] %v1111
        %1124 = vst [vmem:[%s276 + $0x8] sm:$0xff] %v1112
        %1125 = vst [vmem:[%s276 + $0x10] sm:$0xff] %v1113
        %1126 = vst [vmem:[%s276 + $0x18] sm:$0xff] %v1114
        %1127 = vst [vmem:[%s276 + $0x20] sm:$0xff] %v1115
        %1128 = vst [vmem:[%s276 + $0x28] sm:$0xff] %v1116
        %s1129 = sand.u32 %s157, 1
        %s1130 = scalar_lea.sflag [#allocation4], %s1129
        %s1131 = sand.u32 %s157, 1
        %s1132 = smul.addr %s1131, 48
        %s1133 = scalar_lea.vmem [#allocation7], %s1132
        // Predicated region
        $region49: #{tpu_custom_call.1} parent=39 // pred_check
          %p1134 = pneg %p167
        $region50: #{tpu_custom_call.1} parent=39 // pred_check_branch
          %1136 = sbr.rel (%p1134) target = $region52
        $region51: #{tpu_custom_call.1} parent=39 // pred_region
          %s1137 = smul.u32 2, %s28
          %s1139 = ssub.s32 768, 768
          %1140 = vsyncadd %s1130, %s1139
          %s1141 = smul.addr %s1137, 6
          %s1142 = smul.addr %s27, 24
          %s1143 = sadd.s32 %s1141, %s1142
          %s1144 = smul.addr %s1143, 64
          %s1145 = scalar_lea.hbm %s5, %s1144
          %s1146 = sshll.u32 %s1133, 4
          %s1147 = int_to_ptr.vmem [resolvable:$true] %s1146
          %1152 = dma.vmem_to_hbm [thread:$0]  %s1147, 768, %s1145, %s1130, 384, 384, 24
        $region52: #{tpu_custom_call.1} parent=39 // pred_fallthru
          _
      $region40: #{tpu_custom_call.1} parent=5 // pred_fallthru
        _
      %p1153 = scmp.le.s32.totalorder 2, %s18
      // Predicated region
      $region53: #{tpu_custom_call.1} parent=5 // pred_check
        %p1154 = pneg %p1153
      $region54: #{tpu_custom_call.1} parent=5 // pred_check_branch
        %1156 = sbr.rel (%p1154) target = $region56
      $region55: #{tpu_custom_call.1} parent=5 // pred_region
        %s1157 = ssub.s32 %s18, 2
        // Predicated region
        $region57: #{tpu_custom_call.1} parent=55 // pred_check
          %p1158 = pneg %p173
        $region58: #{tpu_custom_call.1} parent=55 // pred_check_branch
          %1160 = sbr.rel (%p1158) target = $region60
        $region59: #{tpu_custom_call.1} parent=55 // pred_region
          %s1161 = sand.u32 %s158, 1
          %s1162 = scalar_lea.sflag [#allocation4], %s1161
          %s1163 = sand.u32 %s158, 1
          %s1164 = smul.addr %s1163, 48
          %s1165 = scalar_lea.vmem [#allocation7], %s1164
          %1166 = dma.done %s1162, 768
        $region60: #{tpu_custom_call.1} parent=55 // pred_fallthru
          _
      $region56: #{tpu_custom_call.1} parent=5 // pred_fallthru
        _
    $region6: #{tpu_custom_call.1} parent=1 // loop_footer
      %s22 = sadd.s32 1, %s18
    $region7: #{tpu_custom_call.1} parent=1 // loop_footer_branch
      %17 = sbr.rel target = $region3
    $region8: #{tpu_custom_call.1} parent=1 // loop_exit
      _
    %1167 = vsyncpa [#allocation3], 1
    %s1168 = scalar_lea.sflag [#allocation3], 1
    %1169 = vsyncpa %s1168, 1
    %1170 = vsyncpa [#allocation6], 1
    %1171 = vsyncpa [#allocation4], 1
    %s1172 = scalar_lea.sflag [#allocation4], 1
    %1173 = vsyncpa %s1172, 1

</llo_original>
